<compile_context>
chip_gen: v7x
topology: tpu7x:2x2x1
jax: 0.10.0
libtpu: 0.0.40
codegen_flags: <defaults>
</compile_context>

<pallas_src>
import functools

import jax
import jax.numpy as jnp
from jax.experimental import pallas as pl
from jax.experimental.pallas import tpu as pltpu


def _round_up(x, m):
    return ((x + m - 1) // m) * m


# ---------------------------------------------------------------------------
# Hardware / capability queries
# ---------------------------------------------------------------------------

@functools.lru_cache(maxsize=None)
def _vmem_budget_bytes():
    """~80% of per-core VMEM capacity (generation-aware), safe fallback."""
    try:
        cap = int(pltpu.get_tpu_info().vmem_capacity_bytes)
    except Exception:
        cap = 64 * 1024 * 1024  # conservative (v7x-sized) fallback
    return int(cap * 0.8)


@functools.lru_cache(maxsize=None)
def _single_buffer_ok():
    """Probe whether BlockSpec(pipeline_mode=pl.Buffered(1)) compiles+runs."""
    try:
        def k(x_ref, o_ref):
            o_ref[...] = x_ref[...]

        x = jnp.zeros((8, 128), jnp.float32)
        f = pl.pallas_call(
            k,
            out_shape=jax.ShapeDtypeStruct((8, 128), jnp.float32),
            grid=(1,),
            in_specs=[pl.BlockSpec((8, 128), lambda i: (0, 0),
                                   pipeline_mode=pl.Buffered(1))],
            out_specs=pl.BlockSpec((8, 128), lambda i: (0, 0)),
        )
        jax.block_until_ready(f(x))
        return True
    except Exception:
        return False


def _resident_spec(shape, index_map):
    """Spec for an operand whose block never changes across the grid.

    Single-buffered when supported (double-buffering a constant block is pure
    VMEM waste); otherwise a plain BlockSpec.
    """
    if _single_buffer_ok():
        return pl.BlockSpec(shape, index_map, pipeline_mode=pl.Buffered(1))
    return pl.BlockSpec(shape, index_map)


# ---------------------------------------------------------------------------
# Kernels
# ---------------------------------------------------------------------------

def _trunk_kernel(feat_ref, w1_ref, b1_ref, w2_ref, b2_ref, w3_ref, b3_ref,
                  h_ref):
    # Layers 1-3: Linear -> Dropout(eval identity) -> Tanh; f32 accumulate.
    h = jnp.tanh(jnp.dot(feat_ref[...], w1_ref[...],
                         preferred_element_type=jnp.float32) + b1_ref[...])
    h = jnp.tanh(jnp.dot(h.astype(jnp.bfloat16), w2_ref[...],
                         preferred_element_type=jnp.float32) + b2_ref[...])
    h = jnp.tanh(jnp.dot(h.astype(jnp.bfloat16), w3_ref[...],
                         preferred_element_type=jnp.float32) + b3_ref[...])
    h_ref[...] = h.astype(h_ref.dtype)


def _proj_kernel(h_ref, w4_ref, b4_ref, out_ref):
    # Output layer tile: Linear(hid, nwords_tile); f32 accumulate.
    out_ref[...] = (
        jnp.dot(h_ref[...], w4_ref[...], preferred_element_type=jnp.float32)
        + b4_ref[...]
    ).astype(out_ref.dtype)


# ---------------------------------------------------------------------------
# Forward wrapper
# ---------------------------------------------------------------------------

def fnn_lm_forward(words, emb_table, params, *, logits_dtype=jnp.float32):
    """words: (B, num_hist) int32. Returns logits (B, nwords) in logits_dtype."""
    (w1, b1), (w2, b2), (w3, b3), (w4, b4) = params
    B, num_hist = words.shape
    emb_size = emb_table.shape[1]
    k1 = num_hist * emb_size
    hid = w1.shape[1]
    hid4 = w2.shape[1]
    nwords = w4.shape[1]

    # Lane-aligned (128) padded dims; batch padded to a bf16 sublane multiple.
    K1 = _round_up(k1, 128)
    H = _round_up(hid, 128)
    H4 = _round_up(hid4, 128)
    V = _round_up(nwords, 128)
    B16 = _round_up(B, 16)

    budget = _vmem_budget_bytes()
    # Generation-aware tile caps: big tiles on 128 MiB VMEM parts (v5e/v6e),
    # smaller on v7x (64 MiB physical).
    if budget >= 80 * 1024 * 1024:
        tm_cap, tn_cap = 512, 1024
    else:
        tm_cap, tn_cap = 256, 512

    tm = min(B16, tm_cap)              # batch (M) tile
    Bp = _round_up(B16, tm)
    tn = min(V, tn_cap)                # vocab (N) tile
    Vp = _round_up(V, tn)

    out_bytes = jnp.dtype(logits_dtype).itemsize

    def pad2(a, r, c):
        return jnp.pad(a, ((0, r - a.shape[0]), (0, c - a.shape[1])))

    # Embedding lookup + flatten (plain JAX glue), emitted in bf16.
    # TODO(synk): fold the gather/pad/cast into the trunk kernel via scalar
    # prefetch + pl.Element row gather so feat never round-trips through HBM.
    emb = jnp.take(emb_table, words, axis=0)            # (B, num_hist, emb)
    feat_p = pad2(emb.reshape(B, k1), Bp, K1).astype(jnp.bfloat16)

    # Weights pre-transposed to (in, out); zero-padded so padded lanes are 0.
    w1p = pad2(w1, K1, H).astype(jnp.bfloat16)
    w2p = pad2(w2, H, H4).astype(jnp.bfloat16)
    w3p = pad2(w3, H4, H).astype(jnp.bfloat16)
    w4p = pad2(w4, H, Vp).astype(jnp.bfloat16)
    b1p = pad2(b1, 1, H).astype(jnp.float32)
    b2p = pad2(b2, 1, H4).astype(jnp.float32)
    b3p = pad2(b3, 1, H).astype(jnp.float32)
    b4p = pad2(b4, 1, Vp).astype(jnp.float32)

    # ---- Kernel 1: MLP trunk (batch-tiled; resident weights read once). ----
    # TODO(synk): K-tile the trunk weights if hid ever grows beyond what fits
    # resident in VMEM (w2/w3 are hid x 4*hid).
    trunk_weight_bytes = (K1 * H + H * H4 + H4 * H) * 2 + (2 * H + H4) * 4
    w_bufs = 1 if _single_buffer_ok() else 2
    trunk_vmem = 2 * tm * K1 * 2 + w_bufs * trunk_weight_bytes + 2 * tm * H * 2
    trunk_limit = int(min(budget, max(trunk_vmem * 5 // 4 + (8 << 20),
                                      32 << 20)))

    h = pl.pallas_call(
        _trunk_kernel,
        out_shape=jax.ShapeDtypeStruct((Bp, H), jnp.bfloat16),
        grid=(Bp // tm,),
        in_specs=[
            pl.BlockSpec((tm, K1), lambda i: (i, 0)),     # feat (batch-tiled)
            _resident_spec((K1, H), lambda i: (0, 0)),    # w1
            _resident_spec((1, H), lambda i: (0, 0)),     # b1
            _resident_spec((H, H4), lambda i: (0, 0)),    # w2
            _resident_spec((1, H4), lambda i: (0, 0)),    # b2
            _resident_spec((H4, H), lambda i: (0, 0)),    # w3
            _resident_spec((1, H), lambda i: (0, 0)),     # b3
        ],
        out_specs=pl.BlockSpec((tm, H), lambda i: (i, 0)),
        compiler_params=pltpu.CompilerParams(
            dimension_semantics=("parallel",),
            vmem_limit_bytes=trunk_limit,
        ),
        cost_estimate=pl.CostEstimate(
            flops=2 * Bp * (K1 * H + H * H4 + H4 * H),
            transcendentals=Bp * (2 * H + H4),
            bytes_accessed=int(Bp * K1 * 2 + trunk_weight_bytes + Bp * H * 2),
        ),
    )(feat_p, w1p, b1p, w2p, b2p, w3p, b3p)

    # ---- Kernel 2: vocab projection. Vocab axis OUTER so the w4 block index
    # is constant over the inner batch axis -> every w4 byte streamed from HBM
    # exactly once; vocab axis "parallel" so v7x's two TCs each stream only
    # half of w4. ----
    proj_vmem = (2 * tm * H * 2                       # h tiles (double-buffered)
                 + 2 * (H * tn * 2 + tn * 4)          # w4/b4 tiles
                 + 2 * tm * tn * out_bytes)           # out tiles
    proj_limit = int(min(budget, max(proj_vmem * 5 // 4 + (8 << 20),
                                     32 << 20)))

    out = pl.pallas_call(
        _proj_kernel,
        out_shape=jax.ShapeDtypeStruct((Bp, Vp), logits_dtype),
        grid=(Vp // tn, Bp // tm),                    # (vocab, batch)
        in_specs=[
            pl.BlockSpec((tm, H), lambda j, i: (i, 0)),   # h  (batch-tiled)
            pl.BlockSpec((H, tn), lambda j, i: (0, j)),   # w4 (vocab-tiled, held over batch)
            pl.BlockSpec((1, tn), lambda j, i: (0, j)),   # b4
        ],
        out_specs=pl.BlockSpec((tm, tn), lambda j, i: (i, j)),
        compiler_params=pltpu.CompilerParams(
            dimension_semantics=("parallel", "arbitrary"),
            vmem_limit_bytes=proj_limit,
        ),
        cost_estimate=pl.CostEstimate(
            flops=2 * Bp * H * Vp,
            transcendentals=0,
            bytes_accessed=int((Vp // tn) * Bp * H * 2   # h re-read per vocab tile
                               + H * Vp * 2 + Vp * 4     # w4 / b4 read once
                               + Bp * Vp * out_bytes),   # logits writeback
        ),
    )(h, w4p, b4p)

    return out[:B, :nwords]


# ---------------------------------------------------------------------------
# Synthetic init + self-test
# ---------------------------------------------------------------------------

def init_params(key, nwords, emb_size, hid_size, num_hist):
    """Deterministic synthetic init (PyTorch-style uniform ranges)."""
    def linear(key, fan_in, fan_out):
        k_w, k_b = jax.random.split(key)
        bound = 1.0 / jnp.sqrt(fan_in)
        # Stored pre-transposed: (in_features, out_features).
        w = jax.random.uniform(k_w, (fan_in, fan_out), jnp.float32, -bound, bound)
        b = jax.random.uniform(k_b, (1, fan_out), jnp.float32, -bound, bound)
        return w, b

    keys = jax.random.split(key, 5)
    emb_table = jax.random.normal(keys[0], (nwords, emb_size), jnp.float32)
    p1 = linear(keys[1], num_hist * emb_size, hid_size)
    p2 = linear(keys[2], hid_size, hid_size * 4)
    p3 = linear(keys[3], hid_size * 4, hid_size)
    p4 = linear(keys[4], hid_size, nwords)
    return emb_table, (p1, p2, p3, p4)


if __name__ == "__main__":
    nwords, emb_size, hid_size, num_hist = 100, 16, 32, 3
    batch = 8

    key = jax.random.PRNGKey(0)
    k_params, k_words = jax.random.split(key)
    emb_table, params = init_params(k_params, nwords, emb_size, hid_size, num_hist)
    words = jax.random.randint(k_words, (batch, num_hist), 0, nwords, dtype=jnp.int32)

    logits = fnn_lm_forward(words, emb_table, params)
    logits = jax.block_until_ready(logits)

    # Pure-JAX reference of the MLP path, mirroring the kernel's bf16 casts.
    (w1, b1), (w2, b2), (w3, b3), (w4, b4) = params

    def bf(x):
        return x.astype(jnp.bfloat16).astype(jnp.float32)

    feat = jnp.take(emb_table, words, axis=0).reshape(batch, -1)
    h = jnp.tanh(bf(feat) @ bf(w1) + b1)
    h = jnp.tanh(bf(h) @ bf(w2) + b2)
    h = jnp.tanh(bf(h) @ bf(w3) + b3)
    ref = bf(h) @ bf(w4) + b4

    assert logits.shape == (batch, nwords)
    assert jnp.allclose(logits, ref, atol=2e-2, rtol=2e-2), (
        float(jnp.max(jnp.abs(logits - ref))))

    print("KERNEL_OK")
</pallas_src>

<mosaic_0001>
module attributes {stable_mosaic.version = 11 : i64} {
  func.func @k(%arg0: i32, %arg1: memref<8x128xf32, #tpu.memory_space<vmem>>, %arg2: memref<8x128xf32, #tpu.memory_space<vmem>>) attributes {dimension_semantics = [#tpu.dimension_semantics<arbitrary>], iteration_bounds = array<i64: 1>, scalar_prefetch = 0 : i64, scratch_operands = 0 : i64, tpu.core_type = #tpu.core_type<tc>, window_params = [{pipeline_mode = #tpu.pipeline_mode<synchronous>, transform_indices = @transform_0, window_bounds = array<i64: 8, 128>}, {pipeline_mode = #tpu.pipeline_mode<synchronous>, transform_indices = @transform_1, window_bounds = array<i64: 8, 128>}]} {
    %c0 = arith.constant 0 : index
    %c0_0 = arith.constant 0 : index
    %0 = vector.load %arg1[%c0, %c0_0] : memref<8x128xf32, #tpu.memory_space<vmem>>, vector<8x128xf32>
    %c0_1 = arith.constant 0 : index
    %c0_2 = arith.constant 0 : index
    %1 = vector.load %arg2[%c0_1, %c0_2] : memref<8x128xf32, #tpu.memory_space<vmem>>, vector<8x128xf32>
    tpu.vector_store %arg2[%c0_1, %c0_2], %0 {strides = array<i32>} : memref<8x128xf32, #tpu.memory_space<vmem>>, vector<8x128xf32>,
    return
  }
  func.func @transform_0(%arg0: i32) -> (i32, i32) {
    %c0_i32 = arith.constant 0 : i32
    %c0_i32_0 = arith.constant 0 : i32
    %c0_i32_1 = arith.constant 0 : i32
    return %c0_i32, %c0_i32_0 : i32, i32
  }
  func.func @transform_1(%arg0: i32) -> (i32, i32) {
    %c0_i32 = arith.constant 0 : i32
    %c0_i32_0 = arith.constant 0 : i32
    %c0_i32_1 = arith.constant 0 : i32
    return %c0_i32, %c0_i32_0 : i32, i32
  }
}

module attributes {stable_mosaic.version = 11 : i64} {
  func.func @_trunk_kernel(%arg0: i32, %arg1: memref<16x128xbf16, #tpu.memory_space<vmem>>, %arg2: memref<128x128xbf16, #tpu.memory_space<vmem>>, %arg3: memref<1x128xf32, #tpu.memory_space<vmem>>, %arg4: memref<128x128xbf16, #tpu.memory_space<vmem>>, %arg5: memref<1x128xf32, #tpu.memory_space<vmem>>, %arg6: memref<128x128xbf16, #tpu.memory_space<vmem>>, %arg7: memref<1x128xf32, #tpu.memory_space<vmem>>, %arg8: memref<16x128xbf16, #tpu.memory_space<vmem>>) attributes {dimension_semantics = [#tpu.dimension_semantics<parallel>], iteration_bounds = array<i64: 1>, scalar_prefetch = 0 : i64, scratch_operands = 0 : i64, tpu.core_type = #tpu.core_type<tc>, window_params = [{transform_indices = @transform_0, window_bounds = array<i64: 16, 128>}, {pipeline_mode = #tpu.pipeline_mode<synchronous>, transform_indices = @transform_1, window_bounds = array<i64: 128, 128>}, {pipeline_mode = #tpu.pipeline_mode<synchronous>, transform_indices = @transform_2, window_bounds = array<i64: 1, 128>}, {pipeline_mode = #tpu.pipeline_mode<synchronous>, transform_indices = @transform_3, window_bounds = array<i64: 128, 128>}, {pipeline_mode = #tpu.pipeline_mode<synchronous>, transform_indices = @transform_4, window_bounds = array<i64: 1, 128>}, {pipeline_mode = #tpu.pipeline_mode<synchronous>, transform_indices = @transform_5, window_bounds = array<i64: 128, 128>}, {pipeline_mode = #tpu.pipeline_mode<synchronous>, transform_indices = @transform_6, window_bounds = array<i64: 1, 128>}, {transform_indices = @transform_7, window_bounds = array<i64: 16, 128>}]} {
    %c0 = arith.constant 0 : index
    %c0_0 = arith.constant 0 : index
    %0 = vector.load %arg1[%c0, %c0_0] : memref<16x128xbf16, #tpu.memory_space<vmem>>, vector<16x128xbf16>
    %c0_1 = arith.constant 0 : index
    %c0_2 = arith.constant 0 : index
    %1 = vector.load %arg2[%c0_1, %c0_2] : memref<128x128xbf16, #tpu.memory_space<vmem>>, vector<128x128xbf16>
    %cst = arith.constant dense<0.000000e+00> : vector<16x128xf32>
    %2 = tpu.matmul %0, %1, %cst {dimension_numbers = #tpu.dot_dimension_numbers<[1], [0], [0], [1], [0, 0, 1, 1], [], []>} : vector<16x128xbf16>, vector<128x128xbf16>, vector<16x128xf32> -> vector<16x128xf32>
    %c0_3 = arith.constant 0 : index
    %c0_4 = arith.constant 0 : index
    %3 = vector.load %arg3[%c0_3, %c0_4] : memref<1x128xf32, #tpu.memory_space<vmem>>, vector<1x128xf32>
    %4 = vector.broadcast %3 : vector<1x128xf32> to vector<16x128xf32>
    %5 = arith.addf %2, %4 : vector<16x128xf32>
    %6 = math.tanh %5 : vector<16x128xf32>
    %7 = arith.truncf %6 : vector<16x128xf32> to vector<16x128xbf16>
    %c0_5 = arith.constant 0 : index
    %c0_6 = arith.constant 0 : index
    %8 = vector.load %arg4[%c0_5, %c0_6] : memref<128x128xbf16, #tpu.memory_space<vmem>>, vector<128x128xbf16>
    %cst_7 = arith.constant dense<0.000000e+00> : vector<16x128xf32>
    %9 = tpu.matmul %7, %8, %cst_7 {dimension_numbers = #tpu.dot_dimension_numbers<[1], [0], [0], [1], [0, 0, 1, 1], [], []>} : vector<16x128xbf16>, vector<128x128xbf16>, vector<16x128xf32> -> vector<16x128xf32>
    %c0_8 = arith.constant 0 : index
    %c0_9 = arith.constant 0 : index
    %10 = vector.load %arg5[%c0_8, %c0_9] : memref<1x128xf32, #tpu.memory_space<vmem>>, vector<1x128xf32>
    %11 = vector.broadcast %10 : vector<1x128xf32> to vector<16x128xf32>
    %12 = arith.addf %9, %11 : vector<16x128xf32>
    %13 = math.tanh %12 : vector<16x128xf32>
    %14 = arith.truncf %13 : vector<16x128xf32> to vector<16x128xbf16>
    %c0_10 = arith.constant 0 : index
    %c0_11 = arith.constant 0 : index
    %15 = vector.load %arg6[%c0_10, %c0_11] : memref<128x128xbf16, #tpu.memory_space<vmem>>, vector<128x128xbf16>
    %cst_12 = arith.constant dense<0.000000e+00> : vector<16x128xf32>
    %16 = tpu.matmul %14, %15, %cst_12 {dimension_numbers = #tpu.dot_dimension_numbers<[1], [0], [0], [1], [0, 0, 1, 1], [], []>} : vector<16x128xbf16>, vector<128x128xbf16>, vector<16x128xf32> -> vector<16x128xf32>
    %c0_13 = arith.constant 0 : index
    %c0_14 = arith.constant 0 : index
    %17 = vector.load %arg7[%c0_13, %c0_14] : memref<1x128xf32, #tpu.memory_space<vmem>>, vector<1x128xf32>
    %18 = vector.broadcast %17 : vector<1x128xf32> to vector<16x128xf32>
    %19 = arith.addf %16, %18 : vector<16x128xf32>
    %20 = math.tanh %19 : vector<16x128xf32>
    %21 = arith.truncf %20 : vector<16x128xf32> to vector<16x128xbf16>
    %c0_15 = arith.constant 0 : index
    %c0_16 = arith.constant 0 : index
    %22 = vector.load %arg8[%c0_15, %c0_16] : memref<16x128xbf16, #tpu.memory_space<vmem>>, vector<16x128xbf16>
    tpu.vector_store %arg8[%c0_15, %c0_16], %21 {strides = array<i32>} : memref<16x128xbf16, #tpu.memory_space<vmem>>, vector<16x128xbf16>,
    return
  }
  func.func @transform_0(%arg0: i32) -> (i32, i32) {
    %c0_i32 = arith.constant 0 : i32
    %c0_i32_0 = arith.constant 0 : i32
    return %arg0, %c0_i32 : i32, i32
  }
  func.func @transform_1(%arg0: i32) -> (i32, i32) {
    %c0_i32 = arith.constant 0 : i32
    %c0_i32_0 = arith.constant 0 : i32
    %c0_i32_1 = arith.constant 0 : i32
    return %c0_i32, %c0_i32_0 : i32, i32
  }
  func.func @transform_2(%arg0: i32) -> (i32, i32) {
    %c0_i32 = arith.constant 0 : i32
    %c0_i32_0 = arith.constant 0 : i32
    %c0_i32_1 = arith.constant 0 : i32
    return %c0_i32, %c0_i32_0 : i32, i32
  }
  func.func @transform_3(%arg0: i32) -> (i32, i32) {
    %c0_i32 = arith.constant 0 : i32
    %c0_i32_0 = arith.constant 0 : i32
    %c0_i32_1 = arith.constant 0 : i32
    return %c0_i32, %c0_i32_0 : i32, i32
  }
  func.func @transform_4(%arg0: i32) -> (i32, i32) {
    %c0_i32 = arith.constant 0 : i32
    %c0_i32_0 = arith.constant 0 : i32
    %c0_i32_1 = arith.constant 0 : i32
    return %c0_i32, %c0_i32_0 : i32, i32
  }
  func.func @transform_5(%arg0: i32) -> (i32, i32) {
    %c0_i32 = arith.constant 0 : i32
    %c0_i32_0 = arith.constant 0 : i32
    %c0_i32_1 = arith.constant 0 : i32
    return %c0_i32, %c0_i32_0 : i32, i32
  }
  func.func @transform_6(%arg0: i32) -> (i32, i32) {
    %c0_i32 = arith.constant 0 : i32
    %c0_i32_0 = arith.constant 0 : i32
    %c0_i32_1 = arith.constant 0 : i32
    return %c0_i32, %c0_i32_0 : i32, i32
  }
  func.func @transform_7(%arg0: i32) -> (i32, i32) {
    %c0_i32 = arith.constant 0 : i32
    %c0_i32_0 = arith.constant 0 : i32
    return %arg0, %c0_i32 : i32, i32
  }
}

</mosaic_0001>

<llo_original>
// kernel: tpu_custom_call.1
$region0: #{tpu_custom_call.1}
  #allocation0 [shape = 'u32[]', space=smem, size = 0x4, offset = 0x4, fixed_abs, tag = 'smem constant byte address 0x4 - core index']
  #allocation1 [shape = 'u32[144,128]{1,0:T(1,128)}', space=vmem, size = 0x12000, scoped, tag = 'internal scratch']
  %s0 = inlined_call_operand.hbm [shape: f32[8,128], index: 0, kind: input, shape index: {}]
  %s1 = inlined_call_operand.hbm [shape: f32[8,128], index: 1, kind: output, shape index: {}]
  %s2 = sld [smem:[#allocation0]]
  $region18: #{tpu_custom_call.1} parent=0
    _
  %s4 = ssub.s32 1, %s2
  %s5 = scalar_select 0, %s4, %s2
  $region1: #{tpu_custom_call.1} parent=0
    #allocation2 [shape = 'u8[4096]{0}', space=vmem, size = 0x1000, scoped, tag = 'input window, operand 0, single buffered']
    #allocation3 [shape = 's32[1]{0}', space=sflag, size = 0x4, scoped, tag = 'scoped memory for tpu_custom_call.1']
    #allocation4 [shape = 's32[1]{0}', space=sflag, size = 0x4, scoped, tag = 'scoped memory for tpu_custom_call.1']
    #allocation5 [shape = 'u8[4096]{0}', space=vmem, size = 0x1000, scoped, tag = 'output window, operand 0, single buffered']
    %6 = vsyncpa [#allocation3], 0
    %7 = vsyncpa [#allocation4], 0
    // Predicated region
    $region2: #{tpu_custom_call.1} parent=1 // pred_check
      _
    $region3: #{tpu_custom_call.1} parent=1 // pred_check_branch
      %9 = sbr.rel (0) target = $region5
    $region4: #{tpu_custom_call.1} parent=1 // pred_region
      %s11 = ssub.s32 128, 128
      %12 = vsyncadd [#allocation3], %s11
      %s14 = sshll.u32 [#allocation2], 4
      %s15 = int_to_ptr.vmem [resolvable:$true] %s14
      %17 = dma.hbm_to_vmem [thread:$0]  %s0, 128, %s15, [#allocation3]
    $region5: #{tpu_custom_call.1} parent=1 // pred_fallthru
      _
    // Predicated region
    $region6: #{tpu_custom_call.1} parent=1 // pred_check
      _
    $region7: #{tpu_custom_call.1} parent=1 // pred_check_branch
      %19 = sbr.rel (0) target = $region9
    $region8: #{tpu_custom_call.1} parent=1 // pred_region
      %20 = dma.done [#allocation3], 128
    $region9: #{tpu_custom_call.1} parent=1 // pred_fallthru
      _
    %v21 = vld [vmem:[#allocation2] sm:$0xff]
    %22 = vst [vmem:[#allocation5] sm:$0xff] %v21
    // Predicated region
    $region10: #{tpu_custom_call.1} parent=1 // pred_check
      _
    $region11: #{tpu_custom_call.1} parent=1 // pred_check_branch
      %24 = sbr.rel (0) target = $region13
    $region12: #{tpu_custom_call.1} parent=1 // pred_region
      %s26 = ssub.s32 128, 128
      %27 = vsyncadd [#allocation4], %s26
      %s29 = sshll.u32 [#allocation5], 4
      %s30 = int_to_ptr.vmem [resolvable:$true] %s29
      %32 = dma.vmem_to_hbm [thread:$0]  %s30, 128, %s1, [#allocation4]
    $region13: #{tpu_custom_call.1} parent=1 // pred_fallthru
      _
    // Predicated region
    $region14: #{tpu_custom_call.1} parent=1 // pred_check
      _
    $region15: #{tpu_custom_call.1} parent=1 // pred_check_branch
      %34 = sbr.rel (0) target = $region17
    $region16: #{tpu_custom_call.1} parent=1 // pred_region
      %35 = dma.done [#allocation4], 128
    $region17: #{tpu_custom_call.1} parent=1 // pred_fallthru
      _
    %36 = vsyncpa [#allocation3], 1
    %37 = vsyncpa [#allocation4], 1

// kernel: tpu_custom_call.1
$region0: #{tpu_custom_call.1}
  #allocation0 [shape = 'u32[]', space=smem, size = 0x4, offset = 0x4, fixed_abs, tag = 'smem constant byte address 0x4 - core index']
  #allocation1 [shape = 'u32[144,128]{1,0:T(1,128)}', space=vmem, size = 0x12000, scoped, tag = 'internal scratch']
  %s0 = inlined_call_operand.hbm [shape: bf16[16,128], index: 0, kind: input, shape index: {}]
  %s1 = inlined_call_operand.hbm [shape: bf16[128,128], index: 1, kind: input, shape index: {}]
  %s2 = inlined_call_operand.vmem [shape: f32[1,128], index: 2, kind: input, shape index: {}]
  %s3 = inlined_call_operand.hbm [shape: bf16[128,128], index: 3, kind: input, shape index: {}]
  %s4 = inlined_call_operand.vmem [shape: f32[1,128], index: 4, kind: input, shape index: {}]
  %s5 = inlined_call_operand.hbm [shape: bf16[128,128], index: 5, kind: input, shape index: {}]
  %s6 = inlined_call_operand.vmem [shape: f32[1,128], index: 6, kind: input, shape index: {}]
  %s7 = inlined_call_operand.hbm [shape: bf16[16,128], index: 7, kind: output, shape index: {}]
  %s8 = sld [smem:[#allocation0]]
  $region54: #{tpu_custom_call.1} parent=0
    _
  %s10 = ssub.s32 1, %s8
  %s11 = scalar_select 0, %s10, %s8
  $region1: #{tpu_custom_call.1} parent=0
    #allocation2 [shape = 'u8[4096]{0}', space=vmem, size = 0x1000, scoped, tag = 'input window, operand 0, single buffered']
    #allocation3 [shape = 's32[1]{0}', space=sflag, size = 0x4, scoped, tag = 'scoped memory for tpu_custom_call.1']
    #allocation4 [shape = 's32[1]{0}', space=sflag, size = 0x4, scoped, tag = 'scoped memory for tpu_custom_call.1']
    #allocation5 [shape = 'u8[32768]{0}', space=vmem, size = 0x8000, scoped, tag = 'input window, operand 1, single buffered']
    #allocation6 [shape = 's32[1]{0}', space=sflag, size = 0x4, scoped, tag = 'scoped memory for tpu_custom_call.1']
    #allocation7 [shape = 'u8[32768]{0}', space=vmem, size = 0x8000, scoped, tag = 'input window, operand 3, single buffered']
    #allocation8 [shape = 'u8[32768]{0}', space=vmem, size = 0x8000, scoped, tag = 'input window, operand 5, single buffered']
    #allocation9 [shape = 's32[1]{0}', space=sflag, size = 0x4, scoped, tag = 'scoped memory for tpu_custom_call.1']
    #allocation10 [shape = 'u8[4096]{0}', space=vmem, size = 0x1000, scoped, tag = 'output window, operand 0, single buffered']
    %12 = vsyncpa [#allocation3], 0
    %13 = vsyncpa [#allocation6], 0
    %14 = vsyncpa [#allocation9], 0
    %15 = vsyncpa [#allocation4], 0
    // Predicated region
    $region2: #{tpu_custom_call.1} parent=1 // pred_check
      _
    $region3: #{tpu_custom_call.1} parent=1 // pred_check_branch
      %17 = sbr.rel (0) target = $region5
    $region4: #{tpu_custom_call.1} parent=1 // pred_region
      %s19 = ssub.s32 128, 128
      %20 = vsyncadd [#allocation3], %s19
      %s21 = sshll.u32 [#allocation2], 4
      %s22 = int_to_ptr.vmem [resolvable:$true] %s21
      %27 = dma.hbm_to_vmem [thread:$0]  %s0, 128, %s22, [#allocation3], 64, 64, 4
    $region5: #{tpu_custom_call.1} parent=1 // pred_fallthru
      _
    // Predicated region
    $region6: #{tpu_custom_call.1} parent=1 // pred_check
      _
    $region7: #{tpu_custom_call.1} parent=1 // pred_check_branch
      %29 = sbr.rel (0) target = $region9
    $region8: #{tpu_custom_call.1} parent=1 // pred_region
      %s31 = ssub.s32 1024, 1024
      %32 = vsyncadd [#allocation6], %s31
      %s33 = sshll.u32 [#allocation5], 4
      %s34 = int_to_ptr.vmem [resolvable:$true] %s33
      %39 = dma.hbm_to_vmem [thread:$0]  %s1, 1024, %s34, [#allocation6], 64, 64, 4
    $region9: #{tpu_custom_call.1} parent=1 // pred_fallthru
      _
    // Predicated region
    $region10: #{tpu_custom_call.1} parent=1 // pred_check
      _
    $region11: #{tpu_custom_call.1} parent=1 // pred_check_branch
      %41 = sbr.rel (0) target = $region13
    $region12: #{tpu_custom_call.1} parent=1 // pred_region
      _
    $region13: #{tpu_custom_call.1} parent=1 // pred_fallthru
      _
    // Predicated region
    $region14: #{tpu_custom_call.1} parent=1 // pred_check
      _
    $region15: #{tpu_custom_call.1} parent=1 // pred_check_branch
      %43 = sbr.rel (0) target = $region17
    $region16: #{tpu_custom_call.1} parent=1 // pred_region
      %s45 = ssub.s32 1024, 1024
      %46 = vsyncadd [#allocation6], %s45
      %s47 = sshll.u32 [#allocation7], 4
      %s48 = int_to_ptr.vmem [resolvable:$true] %s47
      %53 = dma.hbm_to_vmem [thread:$0]  %s3, 1024, %s48, [#allocation6], 64, 64, 4
    $region17: #{tpu_custom_call.1} parent=1 // pred_fallthru
      _
    // Predicated region
    $region18: #{tpu_custom_call.1} parent=1 // pred_check
      _
    $region19: #{tpu_custom_call.1} parent=1 // pred_check_branch
      %55 = sbr.rel (0) target = $region21
    $region20: #{tpu_custom_call.1} parent=1 // pred_region
      _
    $region21: #{tpu_custom_call.1} parent=1 // pred_fallthru
      _
    // Predicated region
    $region22: #{tpu_custom_call.1} parent=1 // pred_check
      _
    $region23: #{tpu_custom_call.1} parent=1 // pred_check_branch
      %57 = sbr.rel (0) target = $region25
    $region24: #{tpu_custom_call.1} parent=1 // pred_region
      %s59 = ssub.s32 1024, 1024
      %60 = vsyncadd [#allocation9], %s59
      %s61 = sshll.u32 [#allocation8], 4
      %s62 = int_to_ptr.vmem [resolvable:$true] %s61
      %67 = dma.hbm_to_vmem [thread:$0]  %s5, 1024, %s62, [#allocation9], 64, 64, 4
    $region25: #{tpu_custom_call.1} parent=1 // pred_fallthru
      _
    // Predicated region
    $region26: #{tpu_custom_call.1} parent=1 // pred_check
      _
    $region27: #{tpu_custom_call.1} parent=1 // pred_check_branch
      %69 = sbr.rel (0) target = $region29
    $region28: #{tpu_custom_call.1} parent=1 // pred_region
      _
    $region29: #{tpu_custom_call.1} parent=1 // pred_fallthru
      _
    // Predicated region
    $region30: #{tpu_custom_call.1} parent=1 // pred_check
      _
    $region31: #{tpu_custom_call.1} parent=1 // pred_check_branch
      %71 = sbr.rel (0) target = $region33
    $region32: #{tpu_custom_call.1} parent=1 // pred_region
      %72 = dma.done [#allocation3], 128
    $region33: #{tpu_custom_call.1} parent=1 // pred_fallthru
      _
    // Predicated region
    $region34: #{tpu_custom_call.1} parent=1 // pred_check
      _
    $region35: #{tpu_custom_call.1} parent=1 // pred_check_branch
      %74 = sbr.rel (0) target = $region37
    $region36: #{tpu_custom_call.1} parent=1 // pred_region
      %75 = dma.done [#allocation6], 1024
    $region37: #{tpu_custom_call.1} parent=1 // pred_fallthru
      _
    // Predicated region
    $region38: #{tpu_custom_call.1} parent=1 // pred_check
      _
    $region39: #{tpu_custom_call.1} parent=1 // pred_check_branch
      %77 = sbr.rel (0) target = $region41
    $region40: #{tpu_custom_call.1} parent=1 // pred_region
      %78 = dma.done [#allocation6], 1024
    $region41: #{tpu_custom_call.1} parent=1 // pred_fallthru
      _
    // Predicated region
    $region42: #{tpu_custom_call.1} parent=1 // pred_check
      _
    $region43: #{tpu_custom_call.1} parent=1 // pred_check_branch
      %80 = sbr.rel (0) target = $region45
    $region44: #{tpu_custom_call.1} parent=1 // pred_region
      %81 = dma.done [#allocation9], 1024
    $region45: #{tpu_custom_call.1} parent=1 // pred_fallthru
      _
    %v83 = vld [vmem:[#allocation2] sm:$0xf]
    %v84 = vld [vmem:[#allocation2 + $0x4] sm:$0xf]
    %v85 = vld [vmem:[#allocation5] sm:$0xf]
    %v86 = vld [vmem:[#allocation5 + $0x4] sm:$0xf]
    %v87 = vld [vmem:[#allocation5 + $0x8] sm:$0xf]
    %v88 = vld [vmem:[#allocation5 + $0xc] sm:$0xf]
    %v89 = vld [vmem:[#allocation5 + $0x10] sm:$0xf]
    %v90 = vld [vmem:[#allocation5 + $0x14] sm:$0xf]
    %v91 = vld [vmem:[#allocation5 + $0x18] sm:$0xf]
    %v92 = vld [vmem:[#allocation5 + $0x1c] sm:$0xf]
    %v93 = vld [vmem:[#allocation5 + $0x20] sm:$0xf]
    %v94 = vld [vmem:[#allocation5 + $0x24] sm:$0xf]
    %v95 = vld [vmem:[#allocation5 + $0x28] sm:$0xf]
    %v96 = vld [vmem:[#allocation5 + $0x2c] sm:$0xf]
    %v97 = vld [vmem:[#allocation5 + $0x30] sm:$0xf]
    %v98 = vld [vmem:[#allocation5 + $0x34] sm:$0xf]
    %v99 = vld [vmem:[#allocation5 + $0x38] sm:$0xf]
    %v100 = vld [vmem:[#allocation5 + $0x3c] sm:$0xf]
    %v101 = vld [vmem:[%s2] sm:$0x1]
    %v103 = vlaneseq
    %v104 = vshrl.u32 %v103, 7
    %v105 = vsub.s32 0, %v104
    %v106 = vrot.slane %v101, %v105
    %v110 = vunpack.c.l.b16 %v83
    %v111 = vunpack.c.l.b16 %v84
    %v112 = vpack.c.b16 %v111, %v110
    %v130 = vunpack.c.l.b16 %v85
    %v131 = vunpack.c.l.b16 %v86
    %v132 = vunpack.c.l.b16 %v87
    %v133 = vunpack.c.l.b16 %v88
    %v134 = vunpack.c.l.b16 %v89
    %v135 = vunpack.c.l.b16 %v90
    %v136 = vunpack.c.l.b16 %v91
    %v137 = vunpack.c.l.b16 %v92
    %v138 = vunpack.c.l.b16 %v93
    %v139 = vunpack.c.l.b16 %v94
    %v140 = vunpack.c.l.b16 %v95
    %v141 = vunpack.c.l.b16 %v96
    %v142 = vunpack.c.l.b16 %v97
    %v143 = vunpack.c.l.b16 %v98
    %v144 = vunpack.c.l.b16 %v99
    %v145 = vunpack.c.l.b16 %v100
    %v146 = vpack.c.b16 %v131, %v130
    %v147 = vpack.c.b16 %v133, %v132
    %v148 = vpack.c.b16 %v135, %v134
    %v149 = vpack.c.b16 %v137, %v136
    %v150 = vpack.c.b16 %v139, %v138
    %v151 = vpack.c.b16 %v141, %v140
    %v152 = vpack.c.b16 %v143, %v142
    %v153 = vpack.c.b16 %v145, %v144
    %162 = vmatprep.subr.bf16.mxu0 0
    %163 = vmatpush1.bf16.msra.mxu0 %v146
    %164 = vmatprep.subr.bf16.mxu0 0
    %165 = vmatpush1.bf16.msra.mxu0 %v147
    %166 = vmatprep.subr.bf16.mxu0 0
    %167 = vmatpush1.bf16.msra.mxu0 %v148
    %168 = vmatprep.subr.bf16.mxu0 0
    %169 = vmatpush1.bf16.msra.mxu0 %v149
    %170 = vmatprep.subr.bf16.mxu0 0
    %171 = vmatpush1.bf16.msra.mxu0 %v150
    %172 = vmatprep.subr.bf16.mxu0 0
    %173 = vmatpush1.bf16.msra.mxu0 %v151
    %174 = vmatprep.subr.bf16.mxu0 0
    %175 = vmatpush1.bf16.msra.mxu0 %v152
    %176 = vmatprep.subr.bf16.mxu0 0
    %177 = vmatpush1.bf16.msra.mxu0 %v153
    %178 = vmatprep.subr.bf16.mxu0 0
    %179 = vmatpush1.bf16.msra.mxu0 0
    %180 = vmatprep.subr.bf16.mxu0 0
    %181 = vmatpush1.bf16.msra.mxu0 0
    %182 = vmatprep.subr.bf16.mxu0 0
    %183 = vmatpush1.bf16.msra.mxu0 0
    %184 = vmatprep.subr.bf16.mxu0 0
    %185 = vmatpush1.bf16.msra.mxu0 0
    %186 = vmatprep.subr.bf16.mxu0 0
    %187 = vmatpush1.bf16.msra.mxu0 0
    %188 = vmatprep.subr.bf16.mxu0 0
    %189 = vmatpush1.bf16.msra.mxu0 0
    %190 = vmatprep.subr.bf16.mxu0 0
    %191 = vmatpush1.bf16.msra.mxu0 0
    %192 = vmatprep.subr.bf16.mxu0 0
    %193 = vmatpush1.bf16.msra.mxu0 0
    %194 = vmatprep.mubr.bf16.mxu0 0
    %195 = vmatmul.mubr.bf16.gmra.mrb[0].mxu0 %v112
    %v196 = vpop.f32.mrb[0].mxu0
    %v197 = vadd.f32 %v106, %v196
    %v198 = vpop.f32.mrb[0].mxu0
    %v199 = vpop.f32.mrb[0].mxu0
    %v200 = vadd.f32 %v106, %v199
    %v201 = vpop.f32.mrb[0].mxu0
    %202 = vdwg.mxu0
    %v203 = vtanh.pop %v197
    %v204 = vtanh.pop %v200
    %v205 = vpack.c.bf16 %v204, %v203
    %v206 = vld [vmem:[#allocation7] sm:$0xf]
    %v207 = vld [vmem:[#allocation7 + $0x4] sm:$0xf]
    %v208 = vld [vmem:[#allocation7 + $0x8] sm:$0xf]
    %v209 = vld [vmem:[#allocation7 + $0xc] sm:$0xf]
    %v210 = vld [vmem:[#allocation7 + $0x10] sm:$0xf]
    %v211 = vld [vmem:[#allocation7 + $0x14] sm:$0xf]
    %v212 = vld [vmem:[#allocation7 + $0x18] sm:$0xf]
    %v213 = vld [vmem:[#allocation7 + $0x1c] sm:$0xf]
    %v214 = vld [vmem:[#allocation7 + $0x20] sm:$0xf]
    %v215 = vld [vmem:[#allocation7 + $0x24] sm:$0xf]
    %v216 = vld [vmem:[#allocation7 + $0x28] sm:$0xf]
    %v217 = vld [vmem:[#allocation7 + $0x2c] sm:$0xf]
    %v218 = vld [vmem:[#allocation7 + $0x30] sm:$0xf]
    %v219 = vld [vmem:[#allocation7 + $0x34] sm:$0xf]
    %v220 = vld [vmem:[#allocation7 + $0x38] sm:$0xf]
    %v221 = vld [vmem:[#allocation7 + $0x3c] sm:$0xf]
    %v222 = vld [vmem:[%s4] sm:$0x1]
    %v224 = vlaneseq
    %v225 = vshrl.u32 %v224, 7
    %v226 = vsub.s32 0, %v225
    %v227 = vrot.slane %v222, %v226
    %v245 = vunpack.c.l.b16 %v206
    %v246 = vunpack.c.l.b16 %v207
    %v247 = vunpack.c.l.b16 %v208
    %v248 = vunpack.c.l.b16 %v209
    %v249 = vunpack.c.l.b16 %v210
    %v250 = vunpack.c.l.b16 %v211
    %v251 = vunpack.c.l.b16 %v212
    %v252 = vunpack.c.l.b16 %v213
    %v253 = vunpack.c.l.b16 %v214
    %v254 = vunpack.c.l.b16 %v215
    %v255 = vunpack.c.l.b16 %v216
    %v256 = vunpack.c.l.b16 %v217
    %v257 = vunpack.c.l.b16 %v218
    %v258 = vunpack.c.l.b16 %v219
    %v259 = vunpack.c.l.b16 %v220
    %v260 = vunpack.c.l.b16 %v221
    %v261 = vpack.c.b16 %v246, %v245
    %v262 = vpack.c.b16 %v248, %v247
    %v263 = vpack.c.b16 %v250, %v249
    %v264 = vpack.c.b16 %v252, %v251
    %v265 = vpack.c.b16 %v254, %v253
    %v266 = vpack.c.b16 %v256, %v255
    %v267 = vpack.c.b16 %v258, %v257
    %v268 = vpack.c.b16 %v260, %v259
    %277 = vmatprep.subr.bf16.mxu0 0
    %278 = vmatpush1.bf16.msra.mxu0 %v261
    %279 = vmatprep.subr.bf16.mxu0 0
    %280 = vmatpush1.bf16.msra.mxu0 %v262
    %281 = vmatprep.subr.bf16.mxu0 0
    %282 = vmatpush1.bf16.msra.mxu0 %v263
    %283 = vmatprep.subr.bf16.mxu0 0
    %284 = vmatpush1.bf16.msra.mxu0 %v264
    %285 = vmatprep.subr.bf16.mxu0 0
    %286 = vmatpush1.bf16.msra.mxu0 %v265
    %287 = vmatprep.subr.bf16.mxu0 0
    %288 = vmatpush1.bf16.msra.mxu0 %v266
    %289 = vmatprep.subr.bf16.mxu0 0
    %290 = vmatpush1.bf16.msra.mxu0 %v267
    %291 = vmatprep.subr.bf16.mxu0 0
    %292 = vmatpush1.bf16.msra.mxu0 %v268
    %293 = vmatprep.subr.bf16.mxu0 0
    %294 = vmatpush1.bf16.msra.mxu0 0
    %295 = vmatprep.subr.bf16.mxu0 0
    %296 = vmatpush1.bf16.msra.mxu0 0
    %297 = vmatprep.subr.bf16.mxu0 0
    %298 = vmatpush1.bf16.msra.mxu0 0
    %299 = vmatprep.subr.bf16.mxu0 0
    %300 = vmatpush1.bf16.msra.mxu0 0
    %301 = vmatprep.subr.bf16.mxu0 0
    %302 = vmatpush1.bf16.msra.mxu0 0
    %303 = vmatprep.subr.bf16.mxu0 0
    %304 = vmatpush1.bf16.msra.mxu0 0
    %305 = vmatprep.subr.bf16.mxu0 0
    %306 = vmatpush1.bf16.msra.mxu0 0
    %307 = vmatprep.subr.bf16.mxu0 0
    %308 = vmatpush1.bf16.msra.mxu0 0
    %309 = vmatprep.mubr.bf16.mxu0 0
    %310 = vmatmul.mubr.bf16.gmra.mrb[0].mxu0 %v205
    %v311 = vpop.f32.mrb[0].mxu0
    %v312 = vadd.f32 %v227, %v311
    %v313 = vpop.f32.mrb[0].mxu0
    %v314 = vpop.f32.mrb[0].mxu0
    %v315 = vadd.f32 %v227, %v314
    %v316 = vpop.f32.mrb[0].mxu0
    %317 = vdwg.mxu0
    %v318 = vtanh.pop %v312
    %v319 = vtanh.pop %v315
    %v320 = vpack.c.bf16 %v319, %v318
    %v321 = vld [vmem:[#allocation8] sm:$0xf]
    %v322 = vld [vmem:[#allocation8 + $0x4] sm:$0xf]
    %v323 = vld [vmem:[#allocation8 + $0x8] sm:$0xf]
    %v324 = vld [vmem:[#allocation8 + $0xc] sm:$0xf]
    %v325 = vld [vmem:[#allocation8 + $0x10] sm:$0xf]
    %v326 = vld [vmem:[#allocation8 + $0x14] sm:$0xf]
    %v327 = vld [vmem:[#allocation8 + $0x18] sm:$0xf]
    %v328 = vld [vmem:[#allocation8 + $0x1c] sm:$0xf]
    %v329 = vld [vmem:[#allocation8 + $0x20] sm:$0xf]
    %v330 = vld [vmem:[#allocation8 + $0x24] sm:$0xf]
    %v331 = vld [vmem:[#allocation8 + $0x28] sm:$0xf]
    %v332 = vld [vmem:[#allocation8 + $0x2c] sm:$0xf]
    %v333 = vld [vmem:[#allocation8 + $0x30] sm:$0xf]
    %v334 = vld [vmem:[#allocation8 + $0x34] sm:$0xf]
    %v335 = vld [vmem:[#allocation8 + $0x38] sm:$0xf]
    %v336 = vld [vmem:[#allocation8 + $0x3c] sm:$0xf]
    %v337 = vld [vmem:[%s6] sm:$0x1]
    %v339 = vlaneseq
    %v340 = vshrl.u32 %v339, 7
    %v341 = vsub.s32 0, %v340
    %v342 = vrot.slane %v337, %v341
    %v360 = vunpack.c.l.b16 %v321
    %v361 = vunpack.c.l.b16 %v322
    %v362 = vunpack.c.l.b16 %v323
    %v363 = vunpack.c.l.b16 %v324
    %v364 = vunpack.c.l.b16 %v325
    %v365 = vunpack.c.l.b16 %v326
    %v366 = vunpack.c.l.b16 %v327
    %v367 = vunpack.c.l.b16 %v328
    %v368 = vunpack.c.l.b16 %v329
    %v369 = vunpack.c.l.b16 %v330
    %v370 = vunpack.c.l.b16 %v331
    %v371 = vunpack.c.l.b16 %v332
    %v372 = vunpack.c.l.b16 %v333
    %v373 = vunpack.c.l.b16 %v334
    %v374 = vunpack.c.l.b16 %v335
    %v375 = vunpack.c.l.b16 %v336
    %v376 = vpack.c.b16 %v361, %v360
    %v377 = vpack.c.b16 %v363, %v362
    %v378 = vpack.c.b16 %v365, %v364
    %v379 = vpack.c.b16 %v367, %v366
    %v380 = vpack.c.b16 %v369, %v368
    %v381 = vpack.c.b16 %v371, %v370
    %v382 = vpack.c.b16 %v373, %v372
    %v383 = vpack.c.b16 %v375, %v374
    %392 = vmatprep.subr.bf16.mxu0 0
    %393 = vmatpush1.bf16.msra.mxu0 %v376
    %394 = vmatprep.subr.bf16.mxu0 0
    %395 = vmatpush1.bf16.msra.mxu0 %v377
    %396 = vmatprep.subr.bf16.mxu0 0
    %397 = vmatpush1.bf16.msra.mxu0 %v378
    %398 = vmatprep.subr.bf16.mxu0 0
    %399 = vmatpush1.bf16.msra.mxu0 %v379
    %400 = vmatprep.subr.bf16.mxu0 0
    %401 = vmatpush1.bf16.msra.mxu0 %v380
    %402 = vmatprep.subr.bf16.mxu0 0
    %403 = vmatpush1.bf16.msra.mxu0 %v381
    %404 = vmatprep.subr.bf16.mxu0 0
    %405 = vmatpush1.bf16.msra.mxu0 %v382
    %406 = vmatprep.subr.bf16.mxu0 0
    %407 = vmatpush1.bf16.msra.mxu0 %v383
    %408 = vmatprep.subr.bf16.mxu0 0
    %409 = vmatpush1.bf16.msra.mxu0 0
    %410 = vmatprep.subr.bf16.mxu0 0
    %411 = vmatpush1.bf16.msra.mxu0 0
    %412 = vmatprep.subr.bf16.mxu0 0
    %413 = vmatpush1.bf16.msra.mxu0 0
    %414 = vmatprep.subr.bf16.mxu0 0
    %415 = vmatpush1.bf16.msra.mxu0 0
    %416 = vmatprep.subr.bf16.mxu0 0
    %417 = vmatpush1.bf16.msra.mxu0 0
    %418 = vmatprep.subr.bf16.mxu0 0
    %419 = vmatpush1.bf16.msra.mxu0 0
    %420 = vmatprep.subr.bf16.mxu0 0
    %421 = vmatpush1.bf16.msra.mxu0 0
    %422 = vmatprep.subr.bf16.mxu0 0
    %423 = vmatpush1.bf16.msra.mxu0 0
    %424 = vmatprep.mubr.bf16.mxu0 0
    %425 = vmatmul.mubr.bf16.gmra.mrb[0].mxu0 %v320
    %v426 = vpop.f32.mrb[0].mxu0
    %v427 = vadd.f32 %v342, %v426
    %v428 = vpop.f32.mrb[0].mxu0
    %v429 = vpop.f32.mrb[0].mxu0
    %v430 = vadd.f32 %v342, %v429
    %v431 = vpop.f32.mrb[0].mxu0
    %432 = vdwg.mxu0
    %v433 = vtanh.pop %v427
    %v434 = vtanh.pop %v430
    %v435 = vpack.c.bf16 %v434, %v433
    %v437 = vunpack.c.l.b16 %v435
    %v438 = vunpack.c.h.b16 %v435
    %v439 = vpack.c.b16 %v437, %v437
    %v440 = vpack.c.b16 %v438, %v438
    %443 = vst [vmem:[#allocation10] sm:$0xf] %v439
    %444 = vst [vmem:[#allocation10 + $0x4] sm:$0xf] %v440
    // Predicated region
    $region46: #{tpu_custom_call.1} parent=1 // pred_check
      _
    $region47: #{tpu_custom_call.1} parent=1 // pred_check_branch
      %446 = sbr.rel (0) target = $region49
    $region48: #{tpu_custom_call.1} parent=1 // pred_region
      %s448 = ssub.s32 128, 128
      %449 = vsyncadd [#allocation4], %s448
      %s450 = sshll.u32 [#allocation10], 4
      %s451 = int_to_ptr.vmem [resolvable:$true] %s450
      %456 = dma.vmem_to_hbm [thread:$0]  %s451, 128, %s7, [#allocation4], 64, 64, 4
    $region49: #{tpu_custom_call.1} parent=1 // pred_fallthru
      _
    // Predicated region
    $region50: #{tpu_custom_call.1} parent=1 // pred_check
      _
    $region51: #{tpu_custom_call.1} parent=1 // pred_check_branch
      %458 = sbr.rel (0) target = $region53
    $region52: #{tpu_custom_call.1} parent=1 // pred_region
      %459 = dma.done [#allocation4], 128
    $region53: #{tpu_custom_call.1} parent=1 // pred_fallthru
      _
    %460 = vsyncpa [#allocation3], 1
    %461 = vsyncpa [#allocation6], 1
    %462 = vsyncpa [#allocation9], 1
    %463 = vsyncpa [#allocation4], 1

</llo_original>
